<compile_context>
chip_gen: v5e
topology: v5e:2x2
jax: 0.10.0
libtpu: 0.0.40
codegen_flags: <defaults>
</compile_context>

<pallas_src>
import math
import functools

import jax
import jax.numpy as jnp
from jax.experimental import pallas as pl
from jax.experimental.pallas import tpu as pltpu


def make_pe_table(seq_len: int, d_model: int, dtype=jnp.float32):
    """Same sinusoidal table as the PyTorch __init__, shape (seq_len, d_model)."""
    position = jnp.arange(seq_len, dtype=jnp.float32)[:, None]                       # (S, 1)
    div_term = jnp.exp(
        jnp.arange(0, d_model, 2, dtype=jnp.float32) * (-math.log(10000.0) / d_model)
    )                                                                                # (D//2,)
    angles = position * div_term                                                     # (S, D//2)
    pe = jnp.zeros((seq_len, d_model), jnp.float32)
    pe = pe.at[:, 0::2].set(jnp.sin(angles))
    pe = pe.at[:, 1::2].set(jnp.cos(angles))
    return pe.astype(dtype)


def _pick_rows(n, row_bytes, max_bytes=2 << 20, align=8):
    """Largest divisor of n whose tile fits in max_bytes, preferring 8-aligned rows."""
    target = max(1, max_bytes // max(1, row_bytes))
    best_aligned, best_any = None, None
    for d in range(1, n + 1):
        if n % d == 0 and d <= target:
            best_any = d
            if d % align == 0 or d == n:
                best_aligned = d
    return best_aligned or best_any or 1


def _pe_add_kernel(x_ref, pe_ref, o_ref):
    x = x_ref[...].astype(jnp.float32)
    pe = pe_ref[...].astype(jnp.float32)      # (tile_rows, C) or (1, C); broadcasts
    o_ref[...] = (x + pe).astype(o_ref.dtype)


def _pe_add_dropout_kernel(x_ref, pe_ref, bits_ref, o_ref, *, keep_prob):
    x = x_ref[...].astype(jnp.float32)
    pe = pe_ref[...].astype(jnp.float32)
    y = x + pe
    drop_thresh = jnp.uint32(min(int(round((1.0 - keep_prob) * (2 ** 32))), 2 ** 32 - 1))
    keep = bits_ref[...] >= drop_thresh       # P(keep) = keep_prob
    y = jnp.where(keep, y * (1.0 / keep_prob), jnp.zeros_like(y))
    o_ref[...] = y.astype(o_ref.dtype)


def positional_encoding(x, pe_table, *, dropout_rate=0.1, train=False, rng_key=None):
    """x: (B, S, D).  pe_table: (seq_len_max, D), seq_len_max >= S."""
    B, S, D = x.shape
    Lmax, Dp = pe_table.shape
    assert Dp == D and Lmax >= S, "PE table too small for this sequence length"
    itemsize = jnp.dtype(x.dtype).itemsize

    use_dropout = bool(train) and float(dropout_rate) > 0.0
    keep_prob = 1.0 - float(dropout_rate)

    if D % 128 == 0:
        # Lane-dense path for real transformer widths: flatten batch+seq rows.
        C = D
        x2 = x.reshape(B * S, C)
        tile_rows = _pick_rows(S, C * itemsize)
        n_s_tiles = S // tile_rows
        grid = (B * n_s_tiles,)
        x_spec = pl.BlockSpec((tile_rows, C), lambda i: (i, 0))
        # PE stays as the full table in HBM; each step pulls only its seq tile.
        pe_arr = pe_table
        pe_spec = pl.BlockSpec((tile_rows, C), lambda i: (i % n_s_tiles, 0))
        out_rows = B * S
    else:
        # Small / odd d_model (test case D=32): fold seq*d_model into the lane axis
        # so stores are lane-dense (S*D = 256 here, a multiple of 128).
        C = S * D
        x2 = x.reshape(B, C)
        tile_rows = _pick_rows(B, C * itemsize)
        grid = (B // tile_rows,)
        x_spec = pl.BlockSpec((tile_rows, C), lambda i: (i, 0))
        pe_arr = pe_table[:S].reshape(1, C)
        pe_spec = pl.BlockSpec((1, C), lambda i: (0, 0))
        out_rows = B

    out_spec = pl.BlockSpec((tile_rows, C), lambda i: (i, 0))
    out_shape = jax.ShapeDtypeStruct((out_rows, C), x.dtype)
    compiler_params = pltpu.CompilerParams(dimension_semantics=("parallel",))

    if use_dropout:
        if rng_key is None:
            rng_key = jax.random.PRNGKey(0)
        # Random bits tiled exactly like x; compare/select/scale happen in-kernel.
        bits = jax.random.bits(rng_key, x2.shape, dtype=jnp.uint32)
        kernel = functools.partial(_pe_add_dropout_kernel, keep_prob=keep_prob)
        out2 = pl.pallas_call(
            kernel,
            out_shape=out_shape,
            grid_spec=pltpu.PrefetchScalarGridSpec(
                num_scalar_prefetch=0,
                grid=grid,
                in_specs=[x_spec, pe_spec, x_spec],
                out_specs=out_spec,
            ),
            compiler_params=compiler_params,
        )(x2, pe_arr, bits)
    else:
        out2 = pl.pallas_call(
            _pe_add_kernel,
            out_shape=out_shape,
            grid_spec=pltpu.PrefetchScalarGridSpec(
                num_scalar_prefetch=0,
                grid=grid,
                in_specs=[x_spec, pe_spec],
                out_specs=out_spec,
            ),
            compiler_params=compiler_params,
        )(x2, pe_arr)

    return out2.reshape(B, S, D)


if __name__ == "__main__":
    # Small shapes consistent with the module: batch=2, seq=8, d_model=32, max seq_len=16.
    B, S, D = 2, 8, 32
    SEQ_LEN_MAX = 16
    DROPOUT = 0.1

    key = jax.random.PRNGKey(0)
    k_x, k_drop = jax.random.split(key)
    x = jax.random.normal(k_x, (B, S, D), dtype=jnp.float32)

    pe_table = make_pe_table(SEQ_LEN_MAX, D, dtype=jnp.float32)
    ref = x + pe_table[None, :S, :]

    # Eval-mode forward (dropout = identity): must match x + pe.
    out_eval = positional_encoding(x, pe_table, dropout_rate=DROPOUT, train=False)
    out_eval = jax.block_until_ready(out_eval)
    assert out_eval.shape == (B, S, D)
    assert jnp.allclose(out_eval, ref, atol=1e-5), "eval-mode mismatch vs reference"

    # Train-mode forward (inverted dropout): every element is either 0 or ref/(1-p).
    out_train = positional_encoding(
        x, pe_table, dropout_rate=DROPOUT, train=True, rng_key=k_drop
    )
    out_train = jax.block_until_ready(out_train)
    assert out_train.shape == (B, S, D)
    scale = 1.0 / (1.0 - DROPOUT)
    ok = jnp.all(
        (jnp.abs(out_train) < 1e-6) | (jnp.abs(out_train - ref * scale) < 1e-4)
    )
    assert bool(ok), "train-mode dropout values inconsistent with reference"

    print("KERNEL_OK")
</pallas_src>

<mosaic_0001>
module attributes {stable_mosaic.version = 11 : i64} {
  func.func @_pe_add_kernel(%arg0: i32, %arg1: memref<2x256xf32, #tpu.memory_space<vmem>>, %arg2: memref<1x256xf32, #tpu.memory_space<vmem>>, %arg3: memref<2x256xf32, #tpu.memory_space<vmem>>) attributes {dimension_semantics = [#tpu.dimension_semantics<parallel>], iteration_bounds = array<i64: 1>, scalar_prefetch = 0 : i64, scratch_operands = 0 : i64, tpu.core_type = #tpu.core_type<tc>, window_params = [{transform_indices = @transform_0, window_bounds = array<i64: 2, 256>}, {pipeline_mode = #tpu.pipeline_mode<synchronous>, transform_indices = @transform_1, window_bounds = array<i64: 1, 256>}, {transform_indices = @transform_2, window_bounds = array<i64: 2, 256>}]} {
    %c0 = arith.constant 0 : index
    %c0_0 = arith.constant 0 : index
    %0 = vector.load %arg1[%c0, %c0_0] : memref<2x256xf32, #tpu.memory_space<vmem>>, vector<2x256xf32>
    %c0_1 = arith.constant 0 : index
    %c0_2 = arith.constant 0 : index
    %1 = vector.load %arg2[%c0_1, %c0_2] : memref<1x256xf32, #tpu.memory_space<vmem>>, vector<1x256xf32>
    %2 = vector.broadcast %1 : vector<1x256xf32> to vector<2x256xf32>
    %3 = arith.addf %0, %2 : vector<2x256xf32>
    %c0_3 = arith.constant 0 : index
    %c0_4 = arith.constant 0 : index
    %4 = vector.load %arg3[%c0_3, %c0_4] : memref<2x256xf32, #tpu.memory_space<vmem>>, vector<2x256xf32>
    tpu.vector_store %arg3[%c0_3, %c0_4], %3 {strides = array<i32>} : memref<2x256xf32, #tpu.memory_space<vmem>>, vector<2x256xf32>,
    return
  }
  func.func @transform_0(%arg0: i32) -> (i32, i32) {
    %c0_i32 = arith.constant 0 : i32
    %c0_i32_0 = arith.constant 0 : i32
    return %arg0, %c0_i32 : i32, i32
  }
  func.func @transform_1(%arg0: i32) -> (i32, i32) {
    %c0_i32 = arith.constant 0 : i32
    %c0_i32_0 = arith.constant 0 : i32
    %c0_i32_1 = arith.constant 0 : i32
    return %c0_i32, %c0_i32_0 : i32, i32
  }
  func.func @transform_2(%arg0: i32) -> (i32, i32) {
    %c0_i32 = arith.constant 0 : i32
    %c0_i32_0 = arith.constant 0 : i32
    return %arg0, %c0_i32 : i32, i32
  }
}

</mosaic_0001>

<llo_original>
// kernel: tpu_custom_call.1
$region0: #{tpu_custom_call.1}
  #allocation0 [shape = 'u32[]', space=smem, size = 0x4, offset = 0x4, fixed_abs, tag = 'smem constant byte address 0x4 - core index']
  #allocation1 [shape = 'u32[72,128]{1,0:T(1,128)}', space=vmem, size = 0x9000, scoped, tag = 'internal scratch']
  %s0 = inlined_call_operand.hbm [shape: f32[2,256], index: 0, kind: input, shape index: {}]
  %s1 = inlined_call_operand.hbm [shape: f32[1,256], index: 1, kind: input, shape index: {}]
  %s2 = inlined_call_operand.hbm [shape: f32[2,256], index: 2, kind: output, shape index: {}]
  %s3 = sld [smem:[#allocation0]]
  $region26: #{tpu_custom_call.1} parent=0
    _
  %s5 = ssub.s32 1, %s3
  %s6 = scalar_select 0, %s5, %s3
  $region1: #{tpu_custom_call.1} parent=0
    #allocation2 [shape = 'u8[2048]{0}', space=vmem, size = 0x800, scoped, tag = 'input window, operand 0, single buffered']
    #allocation3 [shape = 's32[1]{0}', space=sflag, size = 0x4, scoped, tag = 'scoped memory for tpu_custom_call.1']
    #allocation4 [shape = 's32[1]{0}', space=sflag, size = 0x4, scoped, tag = 'scoped memory for tpu_custom_call.1']
    #allocation5 [shape = 'u8[1024]{0}', space=vmem, size = 0x400, scoped, tag = 'input window, operand 1, single buffered']
    #allocation6 [shape = 's32[1]{0}', space=sflag, size = 0x4, scoped, tag = 'scoped memory for tpu_custom_call.1']
    #allocation7 [shape = 'u8[2048]{0}', space=vmem, size = 0x800, scoped, tag = 'output window, operand 0, single buffered']
    %7 = vsyncpa [#allocation3], 0
    %8 = vsyncpa [#allocation6], 0
    %9 = vsyncpa [#allocation4], 0
    // Predicated region
    $region2: #{tpu_custom_call.1} parent=1 // pred_check
      _
    $region3: #{tpu_custom_call.1} parent=1 // pred_check_branch
      %11 = sbr.rel (0) target = $region5
    $region4: #{tpu_custom_call.1} parent=1 // pred_region
      %13 = vsyncadd [#allocation3], 0
      %s15 = sshll.u32 %s0, 4
      %s16 = int_to_ptr.hbm [resolvable:$true] %s15
      %s17 = sshll.u32 [#allocation2], 4
      %s18 = int_to_ptr.vmem [resolvable:$true] %s17
      %20 = dma.hbm_to_vmem [thread:$0]  %s16, 64, %s18, [#allocation3]
    $region5: #{tpu_custom_call.1} parent=1 // pred_fallthru
      _
    // Predicated region
    $region6: #{tpu_custom_call.1} parent=1 // pred_check
      _
    $region7: #{tpu_custom_call.1} parent=1 // pred_check_branch
      %22 = sbr.rel (0) target = $region9
    $region8: #{tpu_custom_call.1} parent=1 // pred_region
      %24 = vsyncadd [#allocation6], 0
      %s26 = sshll.u32 %s1, 4
      %s27 = int_to_ptr.hbm [resolvable:$true] %s26
      %s28 = sshll.u32 [#allocation5], 4
      %s29 = int_to_ptr.vmem [resolvable:$true] %s28
      %31 = dma.hbm_to_vmem [thread:$0]  %s27, 32, %s29, [#allocation6]
    $region9: #{tpu_custom_call.1} parent=1 // pred_fallthru
      _
    // Predicated region
    $region10: #{tpu_custom_call.1} parent=1 // pred_check
      _
    $region11: #{tpu_custom_call.1} parent=1 // pred_check_branch
      %33 = sbr.rel (0) target = $region13
    $region12: #{tpu_custom_call.1} parent=1 // pred_region
      %35 = dma.done [#allocation3], 64
    $region13: #{tpu_custom_call.1} parent=1 // pred_fallthru
      _
    // Predicated region
    $region14: #{tpu_custom_call.1} parent=1 // pred_check
      _
    $region15: #{tpu_custom_call.1} parent=1 // pred_check_branch
      %37 = sbr.rel (0) target = $region17
    $region16: #{tpu_custom_call.1} parent=1 // pred_region
      %39 = dma.done [#allocation6], 32
    $region17: #{tpu_custom_call.1} parent=1 // pred_fallthru
      _
    %v40 = vld [vmem:[#allocation2] sm:$0xf]
    %v41 = vld [vmem:[#allocation5] sm:$0x3]
    %v43 = vperm.slane %v41, 0
    %v44 = vperm.slane %v41, 1
    %v45 = vrot.slane %v44, 6
    %vm46 = vcmask 1041408
    %v47 = vsel %vm46, %v43, %v45
    %v49 = vadd.f32 %v40, %v47
    %50 = vst [vmem:[#allocation7] sm:$0xf] %v49
    // Predicated region
    $region18: #{tpu_custom_call.1} parent=1 // pred_check
      _
    $region19: #{tpu_custom_call.1} parent=1 // pred_check_branch
      %52 = sbr.rel (0) target = $region21
    $region20: #{tpu_custom_call.1} parent=1 // pred_region
      %54 = vsyncadd [#allocation4], 0
      %s56 = sshll.u32 [#allocation7], 4
      %s57 = int_to_ptr.vmem [resolvable:$true] %s56
      %s58 = sshll.u32 %s2, 4
      %s59 = int_to_ptr.hbm [resolvable:$true] %s58
      %61 = dma.vmem_to_hbm [thread:$0]  %s57, 64, %s59, [#allocation4]
    $region21: #{tpu_custom_call.1} parent=1 // pred_fallthru
      _
    // Predicated region
    $region22: #{tpu_custom_call.1} parent=1 // pred_check
      _
    $region23: #{tpu_custom_call.1} parent=1 // pred_check_branch
      %63 = sbr.rel (0) target = $region25
    $region24: #{tpu_custom_call.1} parent=1 // pred_region
      %65 = dma.done [#allocation4], 64
    $region25: #{tpu_custom_call.1} parent=1 // pred_fallthru
      _
    %66 = vsyncpa [#allocation3], 1
    %67 = vsyncpa [#allocation6], 1
    %68 = vsyncpa [#allocation4], 1

</llo_original>
